<compile_context>
chip_gen: v7x
topology: tpu7x:2x2x1
jax: 0.10.0
libtpu: 0.0.40
codegen_flags: <defaults>
</compile_context>

<pallas_src>
import functools

import jax
import jax.numpy as jnp
from jax.experimental import pallas as pl
from jax.experimental.pallas import tpu as pltpu


def _sublane_multiple(dtype) -> int:
    """Native sublane packing granularity per dtype width."""
    itemsize = jnp.dtype(dtype).itemsize
    return {4: 8, 2: 16, 1: 32}.get(itemsize, 8)


def _round_up(x, m):
    return -(-x // m) * m


def _largest_divisor_leq(n, cap):
    for d in range(min(n, cap), 0, -1):
        if n % d == 0:
            return d
    return 1


def _pool_kernel(x_ref, num_ref, den_ref, *, g, tile_t, t_total, ragged):
    """Accumulate sum(x^2) and sum(x) over the (innermost) time-grid axis.

    x_ref:            (tile_b, tile_t, tile_c)   input tile (any dtype)
    num_ref, den_ref: (tile_b, g, tile_c)        f32 partials, VMEM-resident
                                                 across the 'arbitrary' time axis.
    """
    t = pl.program_id(2)

    @pl.when(t == 0)
    def _init():
        num_ref[...] = jnp.zeros(num_ref.shape, num_ref.dtype)
        den_ref[...] = jnp.zeros(den_ref.shape, den_ref.dtype)

    def _accumulate(x):
        if g == 1:
            num_ref[...] += jnp.sum(x * x, axis=1, keepdims=True)
            den_ref[...] += jnp.sum(x, axis=1, keepdims=True)
        else:
            tb, tt, tc = x.shape
            # Split the sublane (time) axis so the reduce is pure vreg-row adds
            # and the accumulator add stays a full (8, lanes) tile; the final
            # 8 -> 1 cross-sublane collapse is deferred to the JAX epilogue.
            xg = x.reshape(tb, tt // g, g, tc)
            num_ref[...] += jnp.sum(xg * xg, axis=1)
            den_ref[...] += jnp.sum(xg, axis=1)

    if ragged:
        last = pl.num_programs(2) - 1

        @pl.when(t < last)
        def _body():
            _accumulate(x_ref[...].astype(jnp.float32))

        @pl.when(t == last)
        def _tail():
            x = x_ref[...].astype(jnp.float32)
            valid = t_total - t * tile_t
            row = jax.lax.broadcasted_iota(jnp.int32, x.shape, 1)
            _accumulate(jnp.where(row < valid, x, jnp.float32(0.0)))
    else:
        _accumulate(x_ref[...].astype(jnp.float32))


def linear_soft_pool(logits, time_decision, *,
                     vmem_budget_bytes=24 * 1024 * 1024,
                     max_tile_c=1024):
    """LinearSoftPool forward: (x**2).sum(1) / x.sum(1).  `logits` is unused."""
    del logits  # unused in the reference forward pass
    x = time_decision
    B, T, C = x.shape
    dtype = x.dtype
    itemsize = jnp.dtype(dtype).itemsize
    sub = _sublane_multiple(dtype)

    # --- 1. Lane fold: (B, T, C) -> (B, T//k, k*C) so the lane dim is ~128. ---
    k = 1
    if C < 128:
        k = max(128 // C, 1)
        while k > 1 and T % k != 0:   # fold only with an exact (free) reshape
            k -= 1
    t_f = T // k
    c_eff = k * C

    # --- 2. Class tiling (only for very large C_eff); exact divisors only. ---
    tile_c = c_eff
    if c_eff > max_tile_c:
        cand_c = (max_tile_c // 128) * 128
        while cand_c >= 128:
            if c_eff % cand_c == 0:
                tile_c = cand_c
                break
            cand_c -= 128
    c_blocks = c_eff // tile_c
    tile_c_pad = _round_up(tile_c, 128)   # lane padding that VMEM actually pays

    # --- 3. Megacore: if B == 1 (and no class split), split folded time into two
    #        pseudo-batch rows so both v7x TensorCores get parallel work. ---
    s = 1
    if B == 1 and c_blocks == 1 and t_f % 2 == 0 and t_f >= 2 * sub:
        s = 2
    b2 = B * s
    t2 = t_f // s
    if k > 1 or s > 1:
        x = x.reshape(b2, t2, c_eff)      # free row-major view

    # --- 4. Batch tiling: exact divisor of b2; ensure >= 2 parallel blocks. ---
    tile_b = _largest_divisor_leq(b2, 8)
    if (b2 // tile_b) * c_blocks < 2 and b2 > 1:
        tile_b = _largest_divisor_leq(b2, max(b2 // 2, 1))
    b_blocks = b2 // tile_b

    # --- 5. Time tile from a padding-aware VMEM budget:
    #        2x input tile (double buffer) + ~2 tile-sized f32 temporaries. ---
    per_t_row = tile_b * tile_c_pad * (2 * itemsize + 2 * 4)
    cand = max(int(vmem_budget_bytes // max(per_t_row, 1)), 1)
    if cand >= t2:
        tile_t = t2                                   # whole (folded) time axis
    else:
        tile_t = max((cand // sub) * sub, sub)        # sublane-aligned
        tile_t = min(tile_t, t2)
    t_blocks = -(-t2 // tile_t)
    ragged = (t2 % tile_t) != 0

    # Sublane-granular accumulators (8 -> 1 collapse deferred to epilogue).
    g = 8 if tile_t % 8 == 0 else 1

    kernel = functools.partial(_pool_kernel, g=g, tile_t=tile_t,
                               t_total=t2, ragged=ragged)

    acc_shape = jax.ShapeDtypeStruct((b2, g, c_eff), jnp.float32)
    out_spec = pl.BlockSpec((tile_b, g, tile_c), lambda b, c, t: (b, 0, c))
    cost = pl.CostEstimate(
        flops=3 * B * T * C,
        transcendentals=0,
        bytes_accessed=B * T * C * itemsize + 2 * b2 * g * c_eff * 4,
    )

    num, den = pl.pallas_call(
        kernel,
        out_shape=(acc_shape, acc_shape),
        grid_spec=pltpu.PrefetchScalarGridSpec(
            num_scalar_prefetch=0,
            grid=(b_blocks, c_blocks, t_blocks),
            in_specs=[pl.BlockSpec((tile_b, tile_t, tile_c),
                                   lambda b, c, t: (b, t, c))],
            out_specs=[out_spec, out_spec],
        ),
        compiler_params=pltpu.CompilerParams(
            dimension_semantics=("parallel", "parallel", "arbitrary"),
            vmem_limit_bytes=32 * 1024 * 1024,
        ),
        cost_estimate=cost,
    )(x)

    # Tiny epilogue on O(B*C) data: collapse the time-split (s), sublane (g) and
    # lane-fold (k) partials, then divide (matches the PyTorch reference; no eps).
    num = num.reshape(B, s, g, k, C).sum(axis=(1, 2, 3))
    den = den.reshape(B, s, g, k, C).sum(axis=(1, 2, 3))
    return (num / den).astype(dtype)


if __name__ == "__main__":
    key = jax.random.PRNGKey(0)
    keys = jax.random.split(key, 8)

    def reference(td):
        td32 = td.astype(jnp.float32)
        return jnp.sum(td32 ** 2, axis=1) / jnp.sum(td32, axis=1)

    # 1) Main check: small shape, lane-folded (C=32 -> 128 lanes), single time block.
    B, T, C = 2, 16, 32
    td = jax.nn.sigmoid(jax.random.normal(keys[0], (B, T, C), jnp.float32))
    logits = jax.random.normal(keys[1], (B, T, C), jnp.float32)  # unused, as in PyTorch
    out = jax.block_until_ready(linear_soft_pool(logits, td))
    assert out.shape == (B, C) and out.dtype == td.dtype
    assert jnp.allclose(out, reference(td), atol=1e-5, rtol=1e-5), "mismatch (main)"

    # 2) Multi-time-block accumulation path + ragged tail mask (tile_t forced to 8).
    B, T, C = 2, 44, 32
    td = jax.nn.sigmoid(jax.random.normal(keys[2], (B, T, C), jnp.float32))
    out = jax.block_until_ready(linear_soft_pool(None, td, vmem_budget_bytes=8 * 2048))
    assert out.shape == (B, C)
    assert jnp.allclose(out, reference(td), atol=1e-5, rtol=1e-5), "mismatch (accum)"

    # 3) B == 1: folded time split into two pseudo-batch rows (v7x megacore path).
    B, T, C = 1, 64, 32
    td = jax.nn.sigmoid(jax.random.normal(keys[3], (B, T, C), jnp.float32))
    out = jax.block_until_ready(linear_soft_pool(None, td))
    assert out.shape == (B, C)
    assert jnp.allclose(out, reference(td), atol=1e-5, rtol=1e-5), "mismatch (B=1)"

    # 4) C >= 128: no lane fold.
    B, T, C = 2, 24, 256
    td = jax.nn.sigmoid(jax.random.normal(keys[4], (B, T, C), jnp.float32))
    out = jax.block_until_ready(linear_soft_pool(None, td))
    assert out.shape == (B, C)
    assert jnp.allclose(out, reference(td), atol=1e-5, rtol=1e-5), "mismatch (C=256)"

    # 5) bf16 input (f32 accumulation in-kernel, bf16 result).
    B, T, C = 2, 32, 32
    td = jax.nn.sigmoid(
        jax.random.normal(keys[5], (B, T, C), jnp.float32)).astype(jnp.bfloat16)
    out = jax.block_until_ready(linear_soft_pool(None, td))
    assert out.shape == (B, C) and out.dtype == jnp.bfloat16
    assert jnp.allclose(out.astype(jnp.float32), reference(td),
                        atol=2e-2, rtol=2e-2), "mismatch (bf16)"

    print("KERNEL_OK")
</pallas_src>

<mosaic_0001>
module attributes {stable_mosaic.version = 11 : i64} {
  func.func @_pool_kernel(%arg0: i32, %arg1: i32, %arg2: i32, %arg3: memref<1x4x128xf32, #tpu.memory_space<vmem>>, %arg4: memref<1x1x128xf32, #tpu.memory_space<vmem>>, %arg5: memref<1x1x128xf32, #tpu.memory_space<vmem>>) attributes {dimension_semantics = [#tpu.dimension_semantics<parallel>, #tpu.dimension_semantics<parallel>, #tpu.dimension_semantics<arbitrary>], iteration_bounds = array<i64: 2, 1, 1>, scalar_prefetch = 0 : i64, scratch_operands = 0 : i64, tpu.core_type = #tpu.core_type<tc>, window_params = [{transform_indices = @transform_0, window_bounds = array<i64: 1, 4, 128>}, {transform_indices = @transform_1, window_bounds = array<i64: 1, 1, 128>}, {transform_indices = @transform_2, window_bounds = array<i64: 1, 1, 128>}]} {
    %c0_i32 = arith.constant 0 : i32
    %0 = arith.cmpi eq, %arg2, %c0_i32 : i32
    %1 = arith.extui %0 : i1 to i32
    %c0_i32_0 = arith.constant 0 : i32
    %2 = arith.cmpi ne, %1, %c0_i32_0 : i32
    scf.if %2 {
      %cst_16 = arith.constant 0.000000e+00 : f32
      %15 = vector.broadcast %cst_16 : f32 to vector<1x1x128xf32>
      %c0_17 = arith.constant 0 : index
      %c0_18 = arith.constant 0 : index
      %c0_19 = arith.constant 0 : index
      %16 = vector.load %arg4[%c0_17, %c0_18, %c0_19] : memref<1x1x128xf32, #tpu.memory_space<vmem>>, vector<1x1x128xf32>
      tpu.vector_store %arg4[%c0_17, %c0_18, %c0_19], %15 {strides = array<i32>} : memref<1x1x128xf32, #tpu.memory_space<vmem>>, vector<1x1x128xf32>,
      %cst_20 = arith.constant 0.000000e+00 : f32
      %17 = vector.broadcast %cst_20 : f32 to vector<1x1x128xf32>
      %c0_21 = arith.constant 0 : index
      %c0_22 = arith.constant 0 : index
      %c0_23 = arith.constant 0 : index
      %18 = vector.load %arg5[%c0_21, %c0_22, %c0_23] : memref<1x1x128xf32, #tpu.memory_space<vmem>>, vector<1x1x128xf32>
      tpu.vector_store %arg5[%c0_21, %c0_22, %c0_23], %17 {strides = array<i32>} : memref<1x1x128xf32, #tpu.memory_space<vmem>>, vector<1x1x128xf32>,
    } else {
    }
    %c0 = arith.constant 0 : index
    %c0_1 = arith.constant 0 : index
    %c0_2 = arith.constant 0 : index
    %3 = vector.load %arg3[%c0, %c0_1, %c0_2] : memref<1x4x128xf32, #tpu.memory_space<vmem>>, vector<1x4x128xf32>
    %c0_3 = arith.constant 0 : index
    %c0_4 = arith.constant 0 : index
    %c0_5 = arith.constant 0 : index
    %4 = vector.load %arg4[%c0_3, %c0_4, %c0_5] : memref<1x1x128xf32, #tpu.memory_space<vmem>>, vector<1x1x128xf32>
    %5 = arith.mulf %3, %3 : vector<1x4x128xf32>
    %cst = arith.constant dense<0.000000e+00> : vector<1x128xf32>
    %6 = vector.multi_reduction <add>, %5, %cst [1] : vector<1x4x128xf32> to vector<1x128xf32>
    %7 = vector.shape_cast %6 : vector<1x128xf32> to vector<1x1x128xf32>
    %8 = arith.addf %4, %7 : vector<1x1x128xf32>
    %c0_6 = arith.constant 0 : index
    %c0_7 = arith.constant 0 : index
    %c0_8 = arith.constant 0 : index
    %9 = vector.load %arg4[%c0_6, %c0_7, %c0_8] : memref<1x1x128xf32, #tpu.memory_space<vmem>>, vector<1x1x128xf32>
    tpu.vector_store %arg4[%c0_6, %c0_7, %c0_8], %8 {strides = array<i32>} : memref<1x1x128xf32, #tpu.memory_space<vmem>>, vector<1x1x128xf32>,
    %c0_9 = arith.constant 0 : index
    %c0_10 = arith.constant 0 : index
    %c0_11 = arith.constant 0 : index
    %10 = vector.load %arg5[%c0_9, %c0_10, %c0_11] : memref<1x1x128xf32, #tpu.memory_space<vmem>>, vector<1x1x128xf32>
    %cst_12 = arith.constant dense<0.000000e+00> : vector<1x128xf32>
    %11 = vector.multi_reduction <add>, %3, %cst_12 [1] : vector<1x4x128xf32> to vector<1x128xf32>
    %12 = vector.shape_cast %11 : vector<1x128xf32> to vector<1x1x128xf32>
    %13 = arith.addf %10, %12 : vector<1x1x128xf32>
    %c0_13 = arith.constant 0 : index
    %c0_14 = arith.constant 0 : index
    %c0_15 = arith.constant 0 : index
    %14 = vector.load %arg5[%c0_13, %c0_14, %c0_15] : memref<1x1x128xf32, #tpu.memory_space<vmem>>, vector<1x1x128xf32>
    tpu.vector_store %arg5[%c0_13, %c0_14, %c0_15], %13 {strides = array<i32>} : memref<1x1x128xf32, #tpu.memory_space<vmem>>, vector<1x1x128xf32>,
    return
  }
  func.func @transform_0(%arg0: i32, %arg1: i32, %arg2: i32) -> (i32, i32, i32) {
    %c0_i32 = arith.constant 0 : i32
    return %arg0, %arg2, %arg1 : i32, i32, i32
  }
  func.func @transform_1(%arg0: i32, %arg1: i32, %arg2: i32) -> (i32, i32, i32) {
    %c0_i32 = arith.constant 0 : i32
    %c0_i32_0 = arith.constant 0 : i32
    return %arg0, %c0_i32, %arg1 : i32, i32, i32
  }
  func.func @transform_2(%arg0: i32, %arg1: i32, %arg2: i32) -> (i32, i32, i32) {
    %c0_i32 = arith.constant 0 : i32
    %c0_i32_0 = arith.constant 0 : i32
    return %arg0, %c0_i32, %arg1 : i32, i32, i32
  }
}

</mosaic_0001>

<llo_original>
// kernel: tpu_custom_call.1
$region0: #{tpu_custom_call.1}
  #allocation0 [shape = 'u32[]', space=smem, size = 0x4, offset = 0x4, fixed_abs, tag = 'smem constant byte address 0x4 - core index']
  #allocation1 [shape = 'u32[144,128]{1,0:T(1,128)}', space=vmem, size = 0x12000, scoped, tag = 'internal scratch']
  %s0 = inlined_call_operand.hbm [shape: f32[2,4,128], index: 0, kind: input, shape index: {}]
  %s1 = inlined_call_operand.hbm [shape: f32[2,1,128], index: 1, kind: output, shape index: {0}]
  %s2 = inlined_call_operand.hbm [shape: f32[2,1,128], index: 2, kind: output, shape index: {1}]
  %3 = xla_tuple %s1, %s2
  %s4 = sld [smem:[#allocation0]]
  $region53: #{tpu_custom_call.1} parent=0
    _
  %s6 = ssub.s32 1, %s4
  %s7 = scalar_select 0, %s6, %s4
  $region1: #{tpu_custom_call.1} parent=0
    #allocation2 [shape = 'u8[4096]{0}', space=vmem, size = 0x1000, scoped, tag = 'input window, operand 0']
    #allocation3 [shape = 's32[2]{0}', space=sflag, size = 0x8, scoped, tag = 'scoped memory for tpu_custom_call.1']
    #allocation4 [shape = 's32[2]{0}', space=sflag, size = 0x8, scoped, tag = 'scoped memory for tpu_custom_call.1']
    #allocation5 [shape = 'u8[1024]{0}', space=vmem, size = 0x400, scoped, tag = 'output window, operand 0']
    #allocation6 [shape = 'u8[1024]{0}', space=vmem, size = 0x400, scoped, tag = 'output window, operand 1']
    #allocation7 [shape = 's32[2]{0}', space=sflag, size = 0x8, scoped, tag = 'scoped memory for tpu_custom_call.1']
    %8 = vsyncpa [#allocation3], 0
    %s9 = scalar_lea.sflag [#allocation3], 1
    %10 = vsyncpa %s9, 0
    %11 = vsyncpa [#allocation4], 0
    %s12 = scalar_lea.sflag [#allocation4], 1
    %13 = vsyncpa %s12, 0
    %14 = vsyncpa [#allocation7], 0
    %s15 = scalar_lea.sflag [#allocation7], 1
    %16 = vsyncpa %s15, 0
    loop: start=0, step=1, limit=4
    $region2: #{tpu_custom_call.1} parent=1 // loop_pre_header
      _
    $region3: #{tpu_custom_call.1} parent=1 // loop_header
      %s18 = sphi 0, %s22
      %p19 = scmp.ge.s32.totalorder %s18, 4
      %s25 = sphi 0, %s44
      %s26 = sphi 0, %s40
      %s27 = sphi 0, %s36
      %s28 = sphi 0, %s25
      %s29 = sphi 0, %s26
      %s30 = sphi 0, %s27
      %s31 = sphi 0, %s28
      %s32 = sphi 0, %s29
      %s33 = sphi 0, %s30
      %s51 = sphi 0, %s53
      %s54 = sphi 0, %s51
      %s55 = sphi 0, %s54
      %s71 = sphi 0, %s55
      %s79 = sphi 0, %s81
      %s82 = sphi 0, %s79
      %s83 = sphi 0, %s82
      %s99 = sphi 0, %s83
      %s107 = sphi 0, %s109
      %s110 = sphi 0, %s107
      %s111 = sphi 0, %s110
      %s127 = sphi 0, %s111
    $region4: #{tpu_custom_call.1} parent=1 // loop_header_branch
      %21 = sbr.rel (%p19) target = $region8
    $region5: #{tpu_custom_call.1} parent=1 // loop_body
      %s23 = ssub.s32 %s18, 1
      %s24 = ssub.s32 %s18, 2
      %s34 = sadd.s32 1, %s27
      %p35 = scmp.ge.s32.totalorder %s34, 1
      %s36 = scalar_select %p35, 0, %s34
      %s37 = sadd.s32 1, %s26
      %s38 = scalar_select %p35, %s37, %s26
      %p39 = scmp.ge.s32.totalorder %s38, 1
      %s40 = scalar_select %p39, 0, %s38
      %s41 = sadd.s32 1, %s25
      %s42 = scalar_select %p39, %s41, %s25
      %p43 = scmp.ge.s32.totalorder %s42, 2
      %s44 = scalar_select %p43, 0, %s42
      %s45 = ssub.s32 %s25, %s44
      %s46 = ssub.s32 %s27, %s36
      %s47 = sor.u32 %s45, %s46
      %s48 = ssub.s32 %s26, %s40
      %s49 = sor.u32 %s47, %s48
      %p50 = scmp.eq.s32.totalorder %s49, 0
      %s52 = sadd.s32 %s51, 1
      %s53 = scalar_select %p50, %s51, %s52
      %p56 = pneg %p50
      %p57 = scmp.eq.s32.totalorder %s18, 1
      %p58 = por %p56, %p57
      %p59 = scmp.ne.s32.totalorder %s51, %s54
      %p60 = scmp.eq.s32.totalorder %s18, 0
      %p61 = por %p59, %p60
      %p62 = scmp.ne.s32.totalorder %s51, %s54
      %p63 = scmp.eq.s32.totalorder %s23, 1
      %p64 = por %p62, %p63
      %p65 = scmp.ne.s32.totalorder %s54, %s55
      %p66 = scmp.eq.s32.totalorder %s23, 0
      %p67 = por %p65, %p66
      %p68 = scmp.ne.s32.totalorder %s54, %s55
      %p69 = scmp.eq.s32.totalorder %s24, 1
      %p70 = por %p68, %p69
      %p72 = scmp.ne.s32.totalorder %s55, %s71
      %p73 = scmp.eq.s32.totalorder %s24, 0
      %p74 = por %p72, %p73
      %s75 = ssub.s32 %s25, %s44
      %s76 = ssub.s32 %s26, %s40
      %s77 = sor.u32 %s75, %s76
      %p78 = scmp.eq.s32.totalorder %s77, 0
      %s80 = sadd.s32 %s79, 1
      %s81 = scalar_select %p78, %s79, %s80
      %p84 = pneg %p78
      %p85 = scmp.eq.s32.totalorder %s18, 1
      %p86 = por %p84, %p85
      %p87 = scmp.ne.s32.totalorder %s79, %s82
      %p88 = scmp.eq.s32.totalorder %s18, 0
      %p89 = por %p87, %p88
      %p90 = scmp.ne.s32.totalorder %s79, %s82
      %p91 = scmp.eq.s32.totalorder %s23, 1
      %p92 = por %p90, %p91
      %p93 = scmp.ne.s32.totalorder %s82, %s83
      %p94 = scmp.eq.s32.totalorder %s23, 0
      %p95 = por %p93, %p94
      %p96 = scmp.ne.s32.totalorder %s82, %s83
      %p97 = scmp.eq.s32.totalorder %s24, 1
      %p98 = por %p96, %p97
      %p100 = scmp.ne.s32.totalorder %s83, %s99
      %p101 = scmp.eq.s32.totalorder %s24, 0
      %p102 = por %p100, %p101
      %s103 = ssub.s32 %s25, %s44
      %s104 = ssub.s32 %s26, %s40
      %s105 = sor.u32 %s103, %s104
      %p106 = scmp.eq.s32.totalorder %s105, 0
      %s108 = sadd.s32 %s107, 1
      %s109 = scalar_select %p106, %s107, %s108
      %p112 = pneg %p106
      %p113 = scmp.eq.s32.totalorder %s18, 1
      %p114 = por %p112, %p113
      %p115 = scmp.ne.s32.totalorder %s107, %s110
      %p116 = scmp.eq.s32.totalorder %s18, 0
      %p117 = por %p115, %p116
      %p118 = scmp.ne.s32.totalorder %s107, %s110
      %p119 = scmp.eq.s32.totalorder %s23, 1
      %p120 = por %p118, %p119
      %p121 = scmp.ne.s32.totalorder %s110, %s111
      %p122 = scmp.eq.s32.totalorder %s23, 0
      %p123 = por %p121, %p122
      %p124 = scmp.ne.s32.totalorder %s110, %s111
      %p125 = scmp.eq.s32.totalorder %s24, 1
      %p126 = por %p124, %p125
      %p128 = scmp.ne.s32.totalorder %s111, %s127
      %p129 = scmp.eq.s32.totalorder %s24, 0
      %p130 = por %p128, %p129
      %p131 = scmp.le.s32.totalorder 1, %s18
      %p132 = scmp.lt.s32.totalorder %s18, 3
      %p133 = pnand %p131, %p132
      %p134 = pneg %p133
      // Predicated region
      $region9: #{tpu_custom_call.1} parent=5 // pred_check
        _
      $region10: #{tpu_custom_call.1} parent=5 // pred_check_branch
        %136 = sbr.rel (%p133) target = $region12
      $region11: #{tpu_custom_call.1} parent=5 // pred_region
        %s137 = ssub.s32 %s18, 1
      $region12: #{tpu_custom_call.1} parent=5 // pred_fallthru
        _
      %p138 = scmp.lt.s32.totalorder %s18, 2
      // Predicated region
      $region13: #{tpu_custom_call.1} parent=5 // pred_check
        %p139 = pneg %p138
      $region14: #{tpu_custom_call.1} parent=5 // pred_check_branch
        %141 = sbr.rel (%p139) target = $region16
      $region15: #{tpu_custom_call.1} parent=5 // pred_region
        // Predicated region
        $region17: #{tpu_custom_call.1} parent=15 // pred_check
          %p142 = pneg %p61
        $region18: #{tpu_custom_call.1} parent=15 // pred_check_branch
          %144 = sbr.rel (%p142) target = $region20
        $region19: #{tpu_custom_call.1} parent=15 // pred_region
          %s145 = sand.u32 %s51, 1
          %s146 = scalar_lea.sflag [#allocation3], %s145
          %s147 = sand.u32 %s51, 1
          %s148 = smul.addr %s147, 4
          %s149 = scalar_lea.vmem [#allocation2], %s148
          %s151 = ssub.s32 64, 64
          %152 = vsyncadd %s146, %s151
          %s153 = sadd.s32 %s26, %s27
          %s154 = sadd.s32 %s153, %s25
          %s155 = smul.addr %s154, 64
          %s156 = scalar_lea.hbm %s0, %s155
          %s158 = sshll.u32 %s149, 4
          %s159 = int_to_ptr.vmem [resolvable:$true] %s158
          %161 = dma.hbm_to_vmem [thread:$0]  %s156, 64, %s159, %s146
        $region20: #{tpu_custom_call.1} parent=15 // pred_fallthru
          _
      $region16: #{tpu_custom_call.1} parent=5 // pred_fallthru
        _
      %p162 = scmp.le.s32.totalorder 1, %s18
      %p163 = scmp.lt.s32.totalorder %s18, 3
      %p164 = pnand %p162, %p163
      %p165 = pneg %p164
      // Predicated region
      $region21: #{tpu_custom_call.1} parent=5 // pred_check
        _
      $region22: #{tpu_custom_call.1} parent=5 // pred_check_branch
        %167 = sbr.rel (%p164) target = $region24
      $region23: #{tpu_custom_call.1} parent=5 // pred_region
        %s168 = ssub.s32 %s18, 1
        %s169 = sand.u32 %s54, 1
        %s170 = scalar_lea.sflag [#allocation3], %s169
        %s171 = sand.u32 %s54, 1
        %s172 = smul.addr %s171, 4
        %s173 = scalar_lea.vmem [#allocation2], %s172
        // Predicated region
        $region25: #{tpu_custom_call.1} parent=23 // pred_check
          %p174 = pneg %p67
        $region26: #{tpu_custom_call.1} parent=23 // pred_check_branch
          %176 = sbr.rel (%p174) target = $region28
        $region27: #{tpu_custom_call.1} parent=23 // pred_region
          %177 = dma.done %s170, 64
        $region28: #{tpu_custom_call.1} parent=23 // pred_fallthru
          _
        %s178 = sand.u32 %s54, 1
        %s179 = scalar_lea.sflag [#allocation3], %s178
        %s180 = sand.u32 %s54, 1
        %s181 = smul.addr %s180, 4
        %s182 = scalar_lea.vmem [#allocation2], %s181
        %p183 = pneg %p67
        %p184 = pneg %p64
        %p185 = pneg %p95
        %p186 = pneg %p92
        %s187 = sand.u32 %s82, 1
        %s188 = scalar_lea.sflag [#allocation4], %s187
        %s189 = sand.u32 %s82, 1
        %s190 = scalar_lea.vmem [#allocation5], %s189
        %p191 = pneg %p123
        %p192 = pneg %p120
        %s193 = sand.u32 %s110, 1
        %s194 = scalar_lea.sflag [#allocation7], %s193
        %s195 = sand.u32 %s110, 1
        %s196 = scalar_lea.vmem [#allocation6], %s195
        %p197 = scmp.eq.s32.totalorder %s30, 0
        // Predicated region
        $region29: #{tpu_custom_call.1} parent=23 // pred_check
          %p198 = pneg %p197
        $region30: #{tpu_custom_call.1} parent=23 // pred_check_branch
          %200 = sbr.rel (%p198) target = $region32
        $region31: #{tpu_custom_call.1} parent=23 // pred_region
          %201 = vst [vmem:[%s190] sm:$0x1] 0.0
          %202 = vst [vmem:[%s196] sm:$0x1] 0.0
        $region32: #{tpu_custom_call.1} parent=23 // pred_fallthru
          _
        %v203 = vld [vmem:[%s173] sm:$0xf]
        %v204 = vld [vmem:[%s190] sm:$0x1]
        %v205 = vmul.f32 %v203, %v203
        %vm206 = vcmask 1043456
        %v207 = vsel %vm206, %v205, 0.0
        %v208 = vrot.slane %v207, 4
        %v209 = vadd.f32 %v207, %v208
        %v210 = vrot.slane %v209, 2
        %v211 = vadd.f32 %v209, %v210
        %v212 = vrot.slane %v211, 1
        %v213 = vadd.f32 %v211, %v212
        %v214 = vadd.f32 %v204, %v213
        %215 = vst [vmem:[%s190] sm:$0x1] %v214
        %v216 = vld [vmem:[%s196] sm:$0x1]
        %v217 = vsel %vm206, %v203, 0.0
        %v218 = vrot.slane %v217, 4
        %v219 = vadd.f32 %v217, %v218
        %v220 = vrot.slane %v219, 2
        %v221 = vadd.f32 %v219, %v220
        %v222 = vrot.slane %v221, 1
        %v223 = vadd.f32 %v221, %v222
        %v224 = vadd.f32 %v216, %v223
        %225 = vst [vmem:[%s196] sm:$0x1] %v224
        %s226 = sand.u32 %s82, 1
        %s227 = scalar_lea.sflag [#allocation4], %s226
        %s228 = sand.u32 %s82, 1
        %s229 = scalar_lea.vmem [#allocation5], %s228
        %s230 = sand.u32 %s110, 1
        %s231 = scalar_lea.sflag [#allocation7], %s230
        %s232 = sand.u32 %s110, 1
        %s233 = scalar_lea.vmem [#allocation6], %s232
        // Predicated region
        $region33: #{tpu_custom_call.1} parent=23 // pred_check
          %p234 = pneg %p92
        $region34: #{tpu_custom_call.1} parent=23 // pred_check_branch
          %236 = sbr.rel (%p234) target = $region36
        $region35: #{tpu_custom_call.1} parent=23 // pred_region
          %s238 = ssub.s32 16, 16
          %239 = vsyncadd %s227, %s238
          %s240 = sadd.s32 %s29, %s28
          %s241 = smul.addr %s240, 16
          %s242 = scalar_lea.hbm %s1, %s241
          %s244 = sshll.u32 %s229, 4
          %s245 = int_to_ptr.vmem [resolvable:$true] %s244
          %247 = dma.vmem_to_hbm [thread:$0]  %s245, 16, %s242, %s227
        $region36: #{tpu_custom_call.1} parent=23 // pred_fallthru
          _
        // Predicated region
        $region37: #{tpu_custom_call.1} parent=23 // pred_check
          %p248 = pneg %p120
        $region38: #{tpu_custom_call.1} parent=23 // pred_check_branch
          %250 = sbr.rel (%p248) target = $region40
        $region39: #{tpu_custom_call.1} parent=23 // pred_region
          %s252 = ssub.s32 16, 16
          %253 = vsyncadd %s231, %s252
          %s254 = sadd.s32 %s29, %s28
          %s255 = smul.addr %s254, 16
          %s256 = scalar_lea.hbm %s2, %s255
          %s258 = sshll.u32 %s233, 4
          %s259 = int_to_ptr.vmem [resolvable:$true] %s258
          %261 = dma.vmem_to_hbm [thread:$0]  %s259, 16, %s256, %s231
        $region40: #{tpu_custom_call.1} parent=23 // pred_fallthru
          _
      $region24: #{tpu_custom_call.1} parent=5 // pred_fallthru
        _
      %p262 = scmp.le.s32.totalorder 2, %s18
      // Predicated region
      $region41: #{tpu_custom_call.1} parent=5 // pred_check
        %p263 = pneg %p262
      $region42: #{tpu_custom_call.1} parent=5 // pred_check_branch
        %265 = sbr.rel (%p263) target = $region44
      $region43: #{tpu_custom_call.1} parent=5 // pred_region
        %s266 = ssub.s32 %s18, 2
        // Predicated region
        $region45: #{tpu_custom_call.1} parent=43 // pred_check
          %p267 = pneg %p98
        $region46: #{tpu_custom_call.1} parent=43 // pred_check_branch
          %269 = sbr.rel (%p267) target = $region48
        $region47: #{tpu_custom_call.1} parent=43 // pred_region
          %s270 = sand.u32 %s83, 1
          %s271 = scalar_lea.sflag [#allocation4], %s270
          %s272 = sand.u32 %s83, 1
          %s273 = scalar_lea.vmem [#allocation5], %s272
          %274 = dma.done %s271, 16
        $region48: #{tpu_custom_call.1} parent=43 // pred_fallthru
          _
        // Predicated region
        $region49: #{tpu_custom_call.1} parent=43 // pred_check
          %p275 = pneg %p126
        $region50: #{tpu_custom_call.1} parent=43 // pred_check_branch
          %277 = sbr.rel (%p275) target = $region52
        $region51: #{tpu_custom_call.1} parent=43 // pred_region
          %s278 = sand.u32 %s111, 1
          %s279 = scalar_lea.sflag [#allocation7], %s278
          %s280 = sand.u32 %s111, 1
          %s281 = scalar_lea.vmem [#allocation6], %s280
          %282 = dma.done %s279, 16
        $region52: #{tpu_custom_call.1} parent=43 // pred_fallthru
          _
      $region44: #{tpu_custom_call.1} parent=5 // pred_fallthru
        _
    $region6: #{tpu_custom_call.1} parent=1 // loop_footer
      %s22 = sadd.s32 1, %s18
    $region7: #{tpu_custom_call.1} parent=1 // loop_footer_branch
      %17 = sbr.rel target = $region3
    $region8: #{tpu_custom_call.1} parent=1 // loop_exit
      _
    %283 = vsyncpa [#allocation3], 1
    %s284 = scalar_lea.sflag [#allocation3], 1
    %285 = vsyncpa %s284, 1
    %286 = vsyncpa [#allocation4], 1
    %s287 = scalar_lea.sflag [#allocation4], 1
    %288 = vsyncpa %s287, 1
    %289 = vsyncpa [#allocation7], 1
    %s290 = scalar_lea.sflag [#allocation7], 1
    %291 = vsyncpa %s290, 1

</llo_original>
